<compile_context>
chip_gen: v5e
topology: v5e:2x2
jax: 0.10.0
libtpu: 0.0.40
codegen_flags: <defaults>
</compile_context>

<pallas_src>
import functools

import jax
import jax.numpy as jnp
from jax import lax
from jax.experimental import pallas as pl
from jax.experimental.pallas import tpu as pltpu


def _round_up(x, m):
    return ((x + m - 1) // m) * m


def _focal_loss_kernel(x_ref, t_ref, out_ref, *, gamma, alpha, n_valid):
    # x_ref: (C, TN) logits — classes on sublanes, rows on lanes (lane-dense)
    # t_ref: (1, TN) int32 targets (lane-dense)
    # out_ref: (8, 128) per-grid-step partial (scalar broadcast, lane-dense)
    k = pl.program_id(0)

    x = x_ref[...].astype(jnp.float32)            # (C, TN)
    t = t_ref[...]                                # (1, TN)
    tn = x.shape[1]

    # numerically stable log-softmax pieces along the class (sublane) axis
    m = jnp.max(x, axis=0, keepdims=True)         # (1, TN)
    z = x - m                                     # (C, TN)
    ez = jnp.exp(z)                               # reused for pt (no 2nd exp)
    sumexp = jnp.sum(ez, axis=0, keepdims=True)   # (1, TN)
    lse = jnp.log(sumexp)                         # (1, TN)

    # gather target-class entries via one-hot select + sublane reduce
    cls = lax.broadcasted_iota(jnp.int32, x.shape, 0)   # class id per sublane
    onehot = cls == t                                   # (C, TN) bool
    z_t = jnp.sum(jnp.where(onehot, z, 0.0), axis=0, keepdims=True)
    ez_t = jnp.sum(jnp.where(onehot, ez, 0.0), axis=0, keepdims=True)

    logpt = jnp.minimum(z_t - lse, 0.0)           # (1, TN), <= 0
    # exact divide (cheap now that it is lane-dense); == exp(logpt)
    pt = ez_t / sumexp

    # alpha weighting: alpha for target>0, (1-alpha) for target<=0
    w = jnp.where(t > 0, jnp.float32(alpha), jnp.float32(1.0 - alpha))
    weighted_logpt = logpt * w

    # focal modulation; gamma is static -> specialize at trace time
    one_minus_pt = jnp.maximum(1.0 - pt, 0.0)
    g = float(gamma)
    if g == 0.0:
        mod = jnp.ones_like(one_minus_pt)
    elif g == int(g) and 0 < int(g) <= 8:
        mod = one_minus_pt
        for _ in range(int(g) - 1):
            mod = mod * one_minus_pt
    else:
        mod = one_minus_pt ** jnp.float32(g)

    loss = -mod * weighted_logpt                  # (1, TN)

    # mask out wrapper-side padded columns (keep n_valid = un-padded N)
    col = lax.broadcasted_iota(jnp.int32, (1, tn), 1) + k * tn
    loss = jnp.where(col < n_valid, loss, 0.0)

    partial = jnp.sum(loss, axis=1, keepdims=True)        # (1, 1)
    # single lane-dense store of this step's partial; wrapper reads [k*8, 0]
    out_ref[...] = jnp.broadcast_to(partial, out_ref.shape)


def focal_loss(logits, target, *, gamma=2.0, alpha=0.25, size_average=True,
               tile_n=8192):
    """logits: (N, C) float, target: (N,) int — returns scalar float32."""
    n, c = logits.shape

    # lane-tile size: multiple of 128, capped at tile_n, shrunk for small N
    tn = max(128, min(_round_up(n, 128), _round_up(int(tile_n), 128)))
    padded_n = _round_up(n, tn)
    k_steps = padded_n // tn
    pad = padded_n - n

    # Lane-dense repack: classes -> sublanes, rows -> lanes.  This is one
    # wrapper-side copy of the logits; the in-kernel column mask zeroes the
    # padded rows.
    # TODO(synk): fuse the (N, C) -> (C, N) repack into the logits producer
    # so the transpose copy disappears entirely.
    xt = jnp.transpose(logits)                     # (C, N)
    tt = target.reshape(1, n).astype(jnp.int32)    # (1, N)
    if pad:
        xt = jnp.pad(xt, ((0, 0), (0, pad)))
        tt = jnp.pad(tt, ((0, 0), (0, pad)))

    kernel = functools.partial(
        _focal_loss_kernel, gamma=float(gamma), alpha=float(alpha), n_valid=n)

    partials = pl.pallas_call(
        kernel,
        out_shape=jax.ShapeDtypeStruct((k_steps * 8, 128), jnp.float32),
        grid_spec=pltpu.PrefetchScalarGridSpec(
            num_scalar_prefetch=0,
            grid=(k_steps,),
            in_specs=[
                pl.BlockSpec((c, tn), lambda k: (0, k)),   # logits (C, tn)
                pl.BlockSpec((1, tn), lambda k: (0, k)),   # targets (1, tn)
            ],
            out_specs=pl.BlockSpec((8, 128), lambda k: (k, 0)),
        ),
        # every step writes its own output block -> safe to shard steps across
        # TensorCores on v7x; plain serial loop (neutral) on v5e/v6e
        compiler_params=pltpu.CompilerParams(
            dimension_semantics=("parallel",)),
    )(xt, tt)

    total = jnp.sum(partials[::8, 0])              # one partial per grid step
    if size_average:
        return total / jnp.float32(n)
    return total


def _focal_loss_ref(logits, target, *, gamma, alpha, size_average):
    """Pure-JAX reference mirroring the PyTorch forward."""
    target = target.reshape(-1)
    logsm = jax.nn.log_softmax(logits, axis=-1)
    logpt = jnp.take_along_axis(logsm, target[:, None], axis=-1)[:, 0]
    pt = jnp.exp(logpt)
    logpt = (logpt * alpha * (target > 0).astype(jnp.float32)
             + logpt * (1.0 - alpha) * (target <= 0).astype(jnp.float32))
    loss = -1.0 * (1.0 - pt) ** gamma * logpt
    return loss.mean() if size_average else loss.sum()


if __name__ == "__main__":
    key = jax.random.PRNGKey(0)
    k1, k2, k3, k4 = jax.random.split(key, 4)

    GAMMA, ALPHA = 2.0, 0.25
    RTOL, ATOL = 1e-3, 1e-4

    # case 1: small, single tile (N=16 rows, C=21 classes)
    n1, c1 = 16, 21
    logits1 = jax.random.normal(k1, (n1, c1), dtype=jnp.float32)
    target1 = jax.random.randint(k2, (n1,), 0, c1, dtype=jnp.int32)
    target1 = target1.at[0].set(0).at[3].set(0)  # exercise both alpha branches

    out1 = jax.block_until_ready(
        focal_loss(logits1, target1, gamma=GAMMA, alpha=ALPHA,
                   size_average=True))
    ref1 = _focal_loss_ref(logits1, target1, gamma=GAMMA, alpha=ALPHA,
                           size_average=True)
    assert jnp.allclose(out1, ref1, rtol=RTOL, atol=ATOL), (out1, ref1)

    # case 2: N not a multiple of 128 and multi-step grid (tile_n=128 ->
    # 3 grid steps) — exercises padding mask + per-step partial summation,
    # both mean and sum reductions
    n2, c2 = 300, 21
    logits2 = jax.random.normal(k3, (n2, c2), dtype=jnp.float32)
    target2 = jax.random.randint(k4, (n2,), 0, c2, dtype=jnp.int32)

    out2m = jax.block_until_ready(
        focal_loss(logits2, target2, gamma=GAMMA, alpha=ALPHA,
                   size_average=True, tile_n=128))
    ref2m = _focal_loss_ref(logits2, target2, gamma=GAMMA, alpha=ALPHA,
                            size_average=True)
    assert jnp.allclose(out2m, ref2m, rtol=RTOL, atol=ATOL), (out2m, ref2m)

    out2s = jax.block_until_ready(
        focal_loss(logits2, target2, gamma=GAMMA, alpha=ALPHA,
                   size_average=False))
    ref2s = _focal_loss_ref(logits2, target2, gamma=GAMMA, alpha=ALPHA,
                            size_average=False)
    assert jnp.allclose(out2s, ref2s, rtol=RTOL, atol=1e-3), (out2s, ref2s)

    print("KERNEL_OK")
</pallas_src>

<mosaic_0001>
module attributes {stable_mosaic.version = 11 : i64} {
  func.func @_focal_loss_kernel(%arg0: i32, %arg1: memref<21x128xf32, #tpu.memory_space<vmem>>, %arg2: memref<1x128xi32, #tpu.memory_space<vmem>>, %arg3: memref<8x128xf32, #tpu.memory_space<vmem>>) attributes {dimension_semantics = [#tpu.dimension_semantics<parallel>], iteration_bounds = array<i64: 1>, scalar_prefetch = 0 : i64, scratch_operands = 0 : i64, tpu.core_type = #tpu.core_type<tc>, window_params = [{transform_indices = @transform_0, window_bounds = array<i64: 21, 128>}, {transform_indices = @transform_1, window_bounds = array<i64: 1, 128>}, {transform_indices = @transform_2, window_bounds = array<i64: 8, 128>}]} {
    %c0 = arith.constant 0 : index
    %c0_0 = arith.constant 0 : index
    %0 = vector.load %arg1[%c0, %c0_0] : memref<21x128xf32, #tpu.memory_space<vmem>>, vector<21x128xf32>
    %c0_1 = arith.constant 0 : index
    %c0_2 = arith.constant 0 : index
    %1 = vector.load %arg2[%c0_1, %c0_2] : memref<1x128xi32, #tpu.memory_space<vmem>>, vector<1x128xi32>
    %cst = arith.constant dense<0xFF800000> : vector<128xf32>
    %2 = vector.multi_reduction <maximumf>, %0, %cst [0] : vector<21x128xf32> to vector<128xf32>
    %3 = vector.shape_cast %2 : vector<128xf32> to vector<1x128xf32>
    %4 = vector.broadcast %3 : vector<1x128xf32> to vector<21x128xf32>
    %5 = arith.subf %0, %4 : vector<21x128xf32>
    %6 = math.exp %5 : vector<21x128xf32>
    %cst_3 = arith.constant dense<0.000000e+00> : vector<128xf32>
    %7 = vector.multi_reduction <add>, %6, %cst_3 [0] : vector<21x128xf32> to vector<128xf32>
    %8 = vector.shape_cast %7 : vector<128xf32> to vector<1x128xf32>
    %9 = math.log %8 : vector<1x128xf32>
    %10 = tpu.iota {dimensions = array<i32: 0>} : vector<21x128xi32>
    %11 = vector.broadcast %1 : vector<1x128xi32> to vector<21x128xi32>
    %12 = arith.cmpi eq, %10, %11 : vector<21x128xi32>
    %cst_4 = arith.constant 0.000000e+00 : f32
    %13 = vector.broadcast %cst_4 : f32 to vector<21x128xf32>
    %14 = arith.select %12, %5, %13 : vector<21x128xi1>, vector<21x128xf32>
    %cst_5 = arith.constant dense<0.000000e+00> : vector<128xf32>
    %15 = vector.multi_reduction <add>, %14, %cst_5 [0] : vector<21x128xf32> to vector<128xf32>
    %16 = vector.shape_cast %15 : vector<128xf32> to vector<1x128xf32>
    %cst_6 = arith.constant 0.000000e+00 : f32
    %17 = vector.broadcast %cst_6 : f32 to vector<21x128xf32>
    %18 = arith.select %12, %6, %17 : vector<21x128xi1>, vector<21x128xf32>
    %cst_7 = arith.constant dense<0.000000e+00> : vector<128xf32>
    %19 = vector.multi_reduction <add>, %18, %cst_7 [0] : vector<21x128xf32> to vector<128xf32>
    %20 = vector.shape_cast %19 : vector<128xf32> to vector<1x128xf32>
    %21 = arith.subf %16, %9 : vector<1x128xf32>
    %cst_8 = arith.constant 0.000000e+00 : f32
    %22 = vector.broadcast %cst_8 : f32 to vector<1x128xf32>
    %23 = arith.minimumf %21, %22 : vector<1x128xf32>
    %24 = arith.divf %20, %8 : vector<1x128xf32>
    %c0_i32 = arith.constant 0 : i32
    %25 = vector.broadcast %c0_i32 : i32 to vector<1x128xi32>
    %26 = arith.cmpi sgt, %1, %25 : vector<1x128xi32>
    %cst_9 = arith.constant 2.500000e-01 : f32
    %cst_10 = arith.constant 7.500000e-01 : f32
    %27 = vector.broadcast %cst_9 : f32 to vector<1x128xf32>
    %28 = vector.broadcast %cst_10 : f32 to vector<1x128xf32>
    %29 = arith.select %26, %27, %28 : vector<1x128xi1>, vector<1x128xf32>
    %30 = arith.mulf %23, %29 : vector<1x128xf32>
    %cst_11 = arith.constant 1.000000e+00 : f32
    %31 = vector.broadcast %cst_11 : f32 to vector<1x128xf32>
    %32 = arith.subf %31, %24 : vector<1x128xf32>
    %cst_12 = arith.constant 0.000000e+00 : f32
    %33 = vector.broadcast %cst_12 : f32 to vector<1x128xf32>
    %34 = arith.maximumf %32, %33 : vector<1x128xf32>
    %35 = arith.mulf %34, %34 : vector<1x128xf32>
    %cst_13 = arith.constant 0.000000e+00 : f32
    %36 = vector.broadcast %cst_13 : f32 to vector<1x128xf32>
    %37 = arith.subf %36, %35 : vector<1x128xf32>
    %38 = arith.mulf %37, %30 : vector<1x128xf32>
    %39 = tpu.iota {dimensions = array<i32: 1>} : vector<1x128xi32>
    %c128_i32 = arith.constant 128 : i32
    %40 = arith.muli %arg0, %c128_i32 : i32
    %41 = vector.broadcast %40 : i32 to vector<1x128xi32>
    %42 = arith.addi %39, %41 : vector<1x128xi32>
    %c16_i32 = arith.constant 16 : i32
    %43 = vector.broadcast %c16_i32 : i32 to vector<1x128xi32>
    %44 = arith.cmpi slt, %42, %43 : vector<1x128xi32>
    %cst_14 = arith.constant 0.000000e+00 : f32
    %45 = vector.broadcast %cst_14 : f32 to vector<1x128xf32>
    %46 = arith.select %44, %38, %45 : vector<1x128xi1>, vector<1x128xf32>
    %cst_15 = arith.constant dense<0.000000e+00> : vector<1xf32>
    %47 = vector.multi_reduction <add>, %46, %cst_15 [1] : vector<1x128xf32> to vector<1xf32>
    %48 = vector.shape_cast %47 : vector<1xf32> to vector<1x1xf32>
    %49 = vector.shape_cast %48 : vector<1x1xf32> to vector<1x1xf32>
    %50 = vector.broadcast %49 : vector<1x1xf32> to vector<8x128xf32>
    %c0_16 = arith.constant 0 : index
    %c0_17 = arith.constant 0 : index
    %51 = vector.load %arg3[%c0_16, %c0_17] : memref<8x128xf32, #tpu.memory_space<vmem>>, vector<8x128xf32>
    tpu.vector_store %arg3[%c0_16, %c0_17], %50 {strides = array<i32>} : memref<8x128xf32, #tpu.memory_space<vmem>>, vector<8x128xf32>,
    return
  }
  func.func @transform_0(%arg0: i32) -> (i32, i32) {
    %c0_i32 = arith.constant 0 : i32
    %c0_i32_0 = arith.constant 0 : i32
    return %c0_i32, %arg0 : i32, i32
  }
  func.func @transform_1(%arg0: i32) -> (i32, i32) {
    %c0_i32 = arith.constant 0 : i32
    %c0_i32_0 = arith.constant 0 : i32
    return %c0_i32, %arg0 : i32, i32
  }
  func.func @transform_2(%arg0: i32) -> (i32, i32) {
    %c0_i32 = arith.constant 0 : i32
    %c0_i32_0 = arith.constant 0 : i32
    return %arg0, %c0_i32 : i32, i32
  }
}

</mosaic_0001>

<llo_original>
// kernel: tpu_custom_call.1
$region0: #{tpu_custom_call.1}
  #allocation0 [shape = 'u32[]', space=smem, size = 0x4, offset = 0x4, fixed_abs, tag = 'smem constant byte address 0x4 - core index']
  #allocation1 [shape = 'u32[72,128]{1,0:T(1,128)}', space=vmem, size = 0x9000, scoped, tag = 'internal scratch']
  %s0 = inlined_call_operand.hbm [shape: f32[21,128], index: 0, kind: input, shape index: {}]
  %s1 = inlined_call_operand.hbm [shape: s32[1,128], index: 1, kind: input, shape index: {}]
  %s2 = inlined_call_operand.hbm [shape: f32[8,128], index: 2, kind: output, shape index: {}]
  %s3 = sld [smem:[#allocation0]]
  $region26: #{tpu_custom_call.1} parent=0
    _
  %s5 = ssub.s32 1, %s3
  %s6 = scalar_select 0, %s5, %s3
  $region1: #{tpu_custom_call.1} parent=0
    #allocation2 [shape = 'u8[12288]{0}', space=vmem, size = 0x3000, scoped, tag = 'input window, operand 0, single buffered']
    #allocation3 [shape = 's32[1]{0}', space=sflag, size = 0x4, scoped, tag = 'scoped memory for tpu_custom_call.1']
    #allocation4 [shape = 's32[1]{0}', space=sflag, size = 0x4, scoped, tag = 'scoped memory for tpu_custom_call.1']
    #allocation5 [shape = 'u8[512]{0}', space=vmem, size = 0x400, scoped, tag = 'input window, operand 1, single buffered']
    #allocation6 [shape = 's32[1]{0}', space=sflag, size = 0x4, scoped, tag = 'scoped memory for tpu_custom_call.1']
    #allocation7 [shape = 'u8[4096]{0}', space=vmem, size = 0x1000, scoped, tag = 'output window, operand 0, single buffered']
    %7 = vsyncpa [#allocation3], 0
    %8 = vsyncpa [#allocation6], 0
    %9 = vsyncpa [#allocation4], 0
    // Predicated region
    $region2: #{tpu_custom_call.1} parent=1 // pred_check
      _
    $region3: #{tpu_custom_call.1} parent=1 // pred_check_branch
      %11 = sbr.rel (0) target = $region5
    $region4: #{tpu_custom_call.1} parent=1 // pred_region
      %13 = vsyncadd [#allocation3], 0
      %s14 = sshll.u32 %s0, 4
      %s15 = int_to_ptr.hbm [resolvable:$true] %s14
      %s16 = sshll.u32 [#allocation2], 4
      %s17 = int_to_ptr.vmem [resolvable:$true] %s16
      %22 = dma.hbm_to_vmem [thread:$0]  %s15, 384, %s17, [#allocation3], 128, 128, 8
    $region5: #{tpu_custom_call.1} parent=1 // pred_fallthru
      _
    // Predicated region
    $region6: #{tpu_custom_call.1} parent=1 // pred_check
      _
    $region7: #{tpu_custom_call.1} parent=1 // pred_check_branch
      %24 = sbr.rel (0) target = $region9
    $region8: #{tpu_custom_call.1} parent=1 // pred_region
      %26 = vsyncadd [#allocation6], 0
      %s28 = sshll.u32 %s1, 4
      %s29 = int_to_ptr.hbm [resolvable:$true] %s28
      %s30 = sshll.u32 [#allocation5], 4
      %s31 = int_to_ptr.vmem [resolvable:$true] %s30
      %33 = dma.hbm_to_vmem [thread:$0]  %s29, 16, %s31, [#allocation6]
    $region9: #{tpu_custom_call.1} parent=1 // pred_fallthru
      _
    // Predicated region
    $region10: #{tpu_custom_call.1} parent=1 // pred_check
      _
    $region11: #{tpu_custom_call.1} parent=1 // pred_check_branch
      %35 = sbr.rel (0) target = $region13
    $region12: #{tpu_custom_call.1} parent=1 // pred_region
      %37 = dma.done [#allocation3], 384
    $region13: #{tpu_custom_call.1} parent=1 // pred_fallthru
      _
    // Predicated region
    $region14: #{tpu_custom_call.1} parent=1 // pred_check
      _
    $region15: #{tpu_custom_call.1} parent=1 // pred_check_branch
      %39 = sbr.rel (0) target = $region17
    $region16: #{tpu_custom_call.1} parent=1 // pred_region
      %41 = dma.done [#allocation6], 16
    $region17: #{tpu_custom_call.1} parent=1 // pred_fallthru
      _
    %v42 = vld [vmem:[#allocation2] sm:$0xff]
    %v43 = vld [vmem:[#allocation2 + $0x8] sm:$0xff]
    %v44 = vld [vmem:[#allocation2 + $0x10] sm:$0x1f]
    %v45 = vld [vmem:[#allocation5] sm:$0x1]
    %vm46 = vcmask 1044480
    %v47 = vsel %vm46, %v44, -inf
    %v48 = vmax.f32 %v42, %v43
    %v49 = vmax.f32 %v48, %v47
    %v50 = vrot.slane %v49, 4
    %v51 = vmax.f32 %v49, %v50
    %v52 = vrot.slane %v51, 2
    %v53 = vmax.f32 %v51, %v52
    %v54 = vrot.slane %v53, 1
    %v55 = vmax.f32 %v53, %v54
    %v56 = vsub.f32 %v42, %v55
    %v57 = vsub.f32 %v43, %v55
    %v58 = vsub.f32 %v44, %v55
    %v59 = vmul.f32 %v56, 1.442695
    %v60 = vpow.pop %v59
    %v61 = vmul.f32 %v57, 1.442695
    %v62 = vpow.pop %v61
    %v63 = vmul.f32 %v58, 1.442695
    %v64 = vpow.pop %v63
    %v65 = vadd.f32 %v60, %v62
    %v66 = vsel %vm46, %v64, 0.0
    %v67 = vadd.f32 %v65, %v66
    %v68 = vrot.slane %v67, 4
    %v69 = vadd.f32 %v67, %v68
    %v70 = vrot.slane %v69, 2
    %v71 = vadd.f32 %v69, %v70
    %v72 = vrot.slane %v71, 1
    %v73 = vadd.f32 %v71, %v72
    %v74 = vlog2.pop %v73
    %v75 = vmul.f32 %v74, 0.6931472
    %v76 = vlaneseq
    %v77 = vshrl.u32 %v76, 7
    %v78 = vadd.s32 %v77, 8
    %v79 = vadd.s32 %v77, 16
    %v80 = vperm.slane %v45, 0
    %vm81 = vcmp.eq.s32.totalorder %v77, %v80
    %vm82 = vcmp.eq.s32.totalorder %v78, %v80
    %vm83 = vcmp.eq.s32.totalorder %v79, %v80
    %v84 = vsel %vm81, %v56, 0.0
    %v85 = vsel %vm82, %v57, 0.0
    %v86 = vsel %vm83, %v58, 0.0
    %v87 = vadd.f32 %v84, %v85
    %v88 = vsel %vm46, %v86, 0.0
    %v89 = vadd.f32 %v87, %v88
    %v90 = vrot.slane %v89, 4
    %v91 = vadd.f32 %v89, %v90
    %v92 = vrot.slane %v91, 2
    %v93 = vadd.f32 %v91, %v92
    %v94 = vrot.slane %v93, 1
    %v95 = vadd.f32 %v93, %v94
    %v96 = vsel %vm81, %v60, 0.0
    %v97 = vsel %vm82, %v62, 0.0
    %v98 = vsel %vm83, %v64, 0.0
    %v99 = vadd.f32 %v96, %v97
    %v100 = vsel %vm46, %v98, 0.0
    %v101 = vadd.f32 %v99, %v100
    %v102 = vrot.slane %v101, 4
    %v103 = vadd.f32 %v101, %v102
    %v104 = vrot.slane %v103, 2
    %v105 = vadd.f32 %v103, %v104
    %v106 = vrot.slane %v105, 1
    %v107 = vadd.f32 %v105, %v106
    %v108 = vsub.f32 %v95, %v75
    %v109 = vmin.f32 %v108, 0.0
    %v110 = vrcp.pop %v73
    %v111 = vmul.f32 %v73, %v110
    %v112 = vsub.f32 1.0, %v111
    %v113 = vmul.f32 %v110, %v112
    %v114 = vadd.f32 %v110, %v113
    %vm115 = vweird.f32 %v73
    %vm116 = vweird.f32 %v110
    %vm117 = vmor %vm115, %vm116
    %v118 = vsel %vm117, %v110, %v114
    %v119 = vand.u32 2147483647, %v73
    %vm120 = vcmp.eq.f32.partialorder %v119, 8.507059e+37
    %v121 = vand.u32 %v73, 2147483648
    %v122 = vor.u32 1.1754944e-38, %v121
    %v123 = vsel %vm120, %v122, %v118
    %v124 = vmul.f32 %v107, %v123
    %vm125 = vcmp.gt.s32.totalorder %v45, 0
    %v126 = vsel %vm125, 0.25, 0.75
    %v127 = vmul.f32 %v109, %v126
    %v128 = vsub.f32 1.0, %v124
    %v129 = vmax.f32 %v128, 0.0
    %v130 = vmul.f32 %v129, %v129
    %v131 = vsub.f32 0.0, %v130
    %v132 = vmul.f32 %v131, %v127
    %v133 = vlaneseq
    %v134 = vand.u32 %v133, 127
    %s135 = smul.u32 0, 128
    %v136 = vstv %s135
    %v137 = vadd.s32 %v134, %v136
    %vm138 = vcmp.lt.s32.totalorder %v137, 16
    %v139 = vsel %vm138, %v132, 0.0
    %vm140 = vcmask 1040384
    %v141 = vsel %vm140, %v139, 0.0
    %142 = vadd.xlane.f32.xlu0 %v141
    %v143 = vpop.xlane.xlu0 %142
    %v144 = vperm.slane %v143, 0
    %145 = vst [vmem:[#allocation7] sm:$0xff] %v144
    // Predicated region
    $region18: #{tpu_custom_call.1} parent=1 // pred_check
      _
    $region19: #{tpu_custom_call.1} parent=1 // pred_check_branch
      %147 = sbr.rel (0) target = $region21
    $region20: #{tpu_custom_call.1} parent=1 // pred_region
      %149 = vsyncadd [#allocation4], 0
      %s151 = sshll.u32 [#allocation7], 4
      %s152 = int_to_ptr.vmem [resolvable:$true] %s151
      %s153 = sshll.u32 %s2, 4
      %s154 = int_to_ptr.hbm [resolvable:$true] %s153
      %156 = dma.vmem_to_hbm [thread:$0]  %s152, 128, %s154, [#allocation4]
    $region21: #{tpu_custom_call.1} parent=1 // pred_fallthru
      _
    // Predicated region
    $region22: #{tpu_custom_call.1} parent=1 // pred_check
      _
    $region23: #{tpu_custom_call.1} parent=1 // pred_check_branch
      %158 = sbr.rel (0) target = $region25
    $region24: #{tpu_custom_call.1} parent=1 // pred_region
      %160 = dma.done [#allocation4], 128
    $region25: #{tpu_custom_call.1} parent=1 // pred_fallthru
      _
    %161 = vsyncpa [#allocation3], 1
    %162 = vsyncpa [#allocation6], 1
    %163 = vsyncpa [#allocation4], 1

</llo_original>
